<compile_context>
chip_gen: v7x
topology: tpu7x:2x2x1
jax: 0.10.0
libtpu: 0.0.40
codegen_flags: <defaults>
</compile_context>

<pallas_src>
import functools

import jax
import jax.numpy as jnp
from jax.experimental import pallas as pl
from jax.experimental.pallas import tpu as pltpu

_LANE = 128
_SUB = 8
_BLOCK_ROWS = 4096          # (4096, 128) f32 = 2 MiB per input buffer (tunable)


def _dice_kernel(x_ref, y_ref, out_ref, *, total_blocks: int, block_rows: int,
                 valid_rows_last: int, has_partial: bool, has_dup: bool):
    c = pl.program_id(0)                 # "parallel" (core-split) axis
    i = pl.program_id(1)                 # "arbitrary" reduction axis
    inner = pl.num_programs(1)
    block_idx = c * inner + i

    @pl.when(i == 0)
    def _():
        out_ref[...] = jnp.zeros_like(out_ref)

    x = x_ref[...].astype(jnp.float32)
    y = y_ref[...].astype(jnp.float32)

    def _accum(xv, yv):
        # sigmoid(x) == 0.5*(tanh(x/2)+1): a single EUP push per logit vreg.
        s = 0.5 * (jnp.tanh(0.5 * xv) + 1.0)
        g = block_rows // _SUB
        s3 = s.reshape(g, _SUB, _LANE)    # groups of 8 rows == whole vregs
        y3 = yv.reshape(g, _SUB, _LANE)
        # Pure vreg adds into the VMEM-resident (8, 128) partials.
        out_ref[0, 0] += jnp.sum(s3 * y3, axis=0)   # intersection partial
        out_ref[0, 1] += jnp.sum(s3, axis=0)        # sum(sigmoid(inputs)) partial
        out_ref[0, 2] += jnp.sum(y3, axis=0)        # sum(outputs) partial

    if has_partial:
        last = total_blocks - 1

        @pl.when(block_idx < last)
        def _():
            _accum(x, y)

        @pl.when(block_idx == last)
        def _():
            # Only the final block pays the mask cost; pure row compare.
            row_ids = jax.lax.broadcasted_iota(jnp.int32, (block_rows, _LANE), 0)
            valid = row_ids < valid_rows_last
            # tanh(0.5 * -1e30) == -1 in f32, so masked logits yield s == 0 and
            # contribute nothing; OOB garbage is replaced before any math.
            _accum(jnp.where(valid, x, jnp.float32(-1e30)),
                   jnp.where(valid, y, jnp.float32(0.0)))
        # Duplicate (clamped) blocks with block_idx >= total_blocks skip both.
    elif has_dup:
        @pl.when(block_idx < total_blocks)
        def _():
            _accum(x, y)
    else:
        _accum(x, y)


def dice_loss(inputs: jax.Array, outputs: jax.Array,
              dice_smooth: float = 1.0) -> jax.Array:
    """Pallas equivalent of DiceLoss.forward(inputs, outputs) -> scalar."""
    x = inputs.reshape(-1)
    y = outputs.reshape(-1)
    n = x.shape[0]
    smooth = jnp.float32(dice_smooth)

    # Kernel processes the 1024-aligned prefix (free (rows,128) re-layout, no
    # pad copy); the tiny tail is reduced in plain XLA below.
    main_n = (n // (_SUB * _LANE)) * (_SUB * _LANE)
    tail_n = n - main_n

    if main_n == 0:
        s = jax.nn.sigmoid(x.astype(jnp.float32))
        yt = y.astype(jnp.float32)
        intersection = jnp.sum(s * yt)
        sum_s = jnp.sum(s)
        sum_y = jnp.sum(yt)
    else:
        rows = main_n // _LANE                    # multiple of 8
        block_rows = min(_BLOCK_ROWS, rows)       # multiple of 8
        total_blocks = pl.cdiv(rows, block_rows)
        valid_rows_last = rows - (total_blocks - 1) * block_rows
        has_partial = valid_rows_last != block_rows

        # Keep both TensorCores streaming even for odd block counts: the
        # duplicate block is clamped in the index_map and skipped in-kernel.
        num_parallel = 2 if total_blocks >= 2 else 1
        inner = pl.cdiv(total_blocks, num_parallel)
        has_dup = num_parallel * inner > total_blocks

        x2 = x[:main_n].reshape(rows, _LANE)      # native dtype (f32/bf16/...)
        y2 = y[:main_n].reshape(rows, _LANE)

        kernel = functools.partial(
            _dice_kernel,
            total_blocks=int(total_blocks),
            block_rows=int(block_rows),
            valid_rows_last=int(valid_rows_last),
            has_partial=bool(has_partial),
            has_dup=bool(has_dup),
        )

        def in_map(c, i):
            # Clamp so the duplicate block's DMA stays in bounds.
            return (jnp.minimum(c * inner + i, total_blocks - 1), 0)

        bytes_accessed = (main_n * (x2.dtype.itemsize + y2.dtype.itemsize)
                          + num_parallel * 3 * _SUB * _LANE * 4)

        partials = pl.pallas_call(
            kernel,
            out_shape=jax.ShapeDtypeStruct((num_parallel, 3, _SUB, _LANE),
                                           jnp.float32),
            grid=(num_parallel, inner),
            in_specs=[
                pl.BlockSpec((block_rows, _LANE), in_map),
                pl.BlockSpec((block_rows, _LANE), in_map),
            ],
            out_specs=pl.BlockSpec((1, 3, _SUB, _LANE),
                                   lambda c, i: (c, 0, 0, 0)),
            compiler_params=pltpu.CompilerParams(
                dimension_semantics=("parallel", "arbitrary"),
                vmem_limit_bytes=32 * 1024 * 1024,
            ),
            cost_estimate=pl.CostEstimate(
                flops=5 * int(main_n),
                transcendentals=int(main_n),
                bytes_accessed=int(bytes_accessed),
            ),
        )(x2, y2)

        # Tiny finalize (num_parallel*3*8*128 elements) in plain XLA.
        sums = jnp.sum(partials, axis=(0, 2, 3))           # (3,)
        intersection, sum_s, sum_y = sums[0], sums[1], sums[2]

        if tail_n:
            st = jax.nn.sigmoid(x[main_n:].astype(jnp.float32))
            yt = y[main_n:].astype(jnp.float32)
            intersection = intersection + jnp.sum(st * yt)
            sum_s = sum_s + jnp.sum(st)
            sum_y = sum_y + jnp.sum(yt)

    dice = (2.0 * intersection + smooth) / (sum_s + sum_y + smooth)
    return jnp.float32(1.0) - dice


def _dice_loss_ref(inputs, outputs, dice_smooth=1.0):
    s = jax.nn.sigmoid(inputs.astype(jnp.float32)).reshape(-1)
    y = outputs.astype(jnp.float32).reshape(-1)
    intersection = jnp.sum(s * y)
    dice = (2.0 * intersection + dice_smooth) / (jnp.sum(s) + jnp.sum(y) + dice_smooth)
    return 1.0 - dice


if __name__ == "__main__":
    key = jax.random.PRNGKey(0)

    # (shape, logits dtype)
    test_cases = [
        ((2, 4, 16, 16), jnp.float32),    # canonical small NCHW, single block
        ((3, 5, 7, 11), jnp.float32),     # ragged -> XLA tail path
        ((2, 4, 16, 16), jnp.bfloat16),   # bf16 logits streamed natively
        ((4, 8, 160, 160), jnp.float32),  # multi-block, 2-way parallel, partial last block
        ((3, 700, 500), jnp.float32),     # odd block count -> clamped dup block + tail
    ]

    ok = True
    for idx, (shape, dtype) in enumerate(test_cases):
        k1, k2 = jax.random.split(jax.random.fold_in(key, idx))
        logits = jax.random.normal(k1, shape, dtype=jnp.float32).astype(dtype)
        targets = (jax.random.uniform(k2, shape) > 0.5).astype(jnp.float32)

        loss = dice_loss(logits, targets, dice_smooth=1.0)
        loss = jax.block_until_ready(loss)

        ref = _dice_loss_ref(logits, targets, dice_smooth=1.0)
        if not jnp.allclose(loss, ref, atol=3e-5, rtol=3e-4):
            ok = False
            print("MISMATCH", shape, dtype, loss, ref)

    assert ok
    print("KERNEL_OK")
</pallas_src>

<mosaic_0001>
module attributes {stable_mosaic.version = 11 : i64} {
  func.func @_dice_kernel(%arg0: i32, %arg1: i32, %arg2: memref<16x128xf32, #tpu.memory_space<vmem>>, %arg3: memref<16x128xf32, #tpu.memory_space<vmem>>, %arg4: memref<1x3x8x128xf32, #tpu.memory_space<vmem>>) attributes {dimension_semantics = [#tpu.dimension_semantics<parallel>, #tpu.dimension_semantics<arbitrary>], iteration_bounds = array<i64: 1, 1>, scalar_prefetch = 0 : i64, scratch_operands = 0 : i64, tpu.core_type = #tpu.core_type<tc>, window_params = [{transform_indices = @transform_0, window_bounds = array<i64: 16, 128>}, {transform_indices = @transform_1, window_bounds = array<i64: 16, 128>}, {transform_indices = @transform_2, window_bounds = array<i64: 1, 3, 8, 128>}]} {
    %c0_i32 = arith.constant 0 : i32
    %0 = arith.cmpi eq, %arg1, %c0_i32 : i32
    %1 = arith.extui %0 : i1 to i32
    %c0_i32_0 = arith.constant 0 : i32
    %2 = arith.cmpi ne, %1, %c0_i32_0 : i32
    scf.if %2 {
      %cst_31 = arith.constant 0.000000e+00 : f32
      %36 = vector.broadcast %cst_31 : f32 to vector<1x3x8x128xf32>
      %c0_32 = arith.constant 0 : index
      %c0_33 = arith.constant 0 : index
      %c0_34 = arith.constant 0 : index
      %c0_35 = arith.constant 0 : index
      %37 = vector.load %arg4[%c0_32, %c0_33, %c0_34, %c0_35] : memref<1x3x8x128xf32, #tpu.memory_space<vmem>>, vector<1x3x8x128xf32>
      tpu.vector_store %arg4[%c0_32, %c0_33, %c0_34, %c0_35], %36 {strides = array<i32>} : memref<1x3x8x128xf32, #tpu.memory_space<vmem>>, vector<1x3x8x128xf32>,
    } else {
    }
    %c0 = arith.constant 0 : index
    %c0_1 = arith.constant 0 : index
    %3 = vector.load %arg2[%c0, %c0_1] : memref<16x128xf32, #tpu.memory_space<vmem>>, vector<16x128xf32>
    %c0_2 = arith.constant 0 : index
    %c0_3 = arith.constant 0 : index
    %4 = vector.load %arg3[%c0_2, %c0_3] : memref<16x128xf32, #tpu.memory_space<vmem>>, vector<16x128xf32>
    %cst = arith.constant 5.000000e-01 : f32
    %5 = vector.broadcast %cst : f32 to vector<16x128xf32>
    %6 = arith.mulf %5, %3 : vector<16x128xf32>
    %7 = math.tanh %6 : vector<16x128xf32>
    %cst_4 = arith.constant 1.000000e+00 : f32
    %8 = vector.broadcast %cst_4 : f32 to vector<16x128xf32>
    %9 = arith.addf %7, %8 : vector<16x128xf32>
    %cst_5 = arith.constant 5.000000e-01 : f32
    %10 = vector.broadcast %cst_5 : f32 to vector<16x128xf32>
    %11 = arith.mulf %10, %9 : vector<16x128xf32>
    %12 = vector.shape_cast %11 : vector<16x128xf32> to vector<2x8x128xf32>
    %13 = vector.shape_cast %4 : vector<16x128xf32> to vector<2x8x128xf32>
    %c0_6 = arith.constant 0 : index
    %c0_7 = arith.constant 0 : index
    %c0_8 = arith.constant 0 : index
    %c0_9 = arith.constant 0 : index
    %14 = vector.load %arg4[%c0_6, %c0_7, %c0_8, %c0_9] : memref<1x3x8x128xf32, #tpu.memory_space<vmem>>, vector<1x1x8x128xf32>
    %15 = vector.shape_cast %14 : vector<1x1x8x128xf32> to vector<8x128xf32>
    %16 = arith.mulf %12, %13 : vector<2x8x128xf32>
    %cst_10 = arith.constant dense<0.000000e+00> : vector<8x128xf32>
    %17 = vector.multi_reduction <add>, %16, %cst_10 [0] : vector<2x8x128xf32> to vector<8x128xf32>
    %18 = arith.addf %15, %17 : vector<8x128xf32>
    %c0_11 = arith.constant 0 : index
    %c0_12 = arith.constant 0 : index
    %c0_13 = arith.constant 0 : index
    %c0_14 = arith.constant 0 : index
    %19 = vector.load %arg4[%c0_11, %c0_12, %c0_13, %c0_14] : memref<1x3x8x128xf32, #tpu.memory_space<vmem>>, vector<1x1x8x128xf32>
    %20 = vector.shape_cast %19 : vector<1x1x8x128xf32> to vector<8x128xf32>
    %21 = vector.shape_cast %18 : vector<8x128xf32> to vector<1x1x8x128xf32>
    tpu.vector_store %arg4[%c0_11, %c0_12, %c0_13, %c0_14], %21 {strides = array<i32>} : memref<1x3x8x128xf32, #tpu.memory_space<vmem>>, vector<1x1x8x128xf32>,
    %c0_15 = arith.constant 0 : index
    %c1 = arith.constant 1 : index
    %c0_16 = arith.constant 0 : index
    %c0_17 = arith.constant 0 : index
    %22 = vector.load %arg4[%c0_15, %c1, %c0_16, %c0_17] : memref<1x3x8x128xf32, #tpu.memory_space<vmem>>, vector<1x1x8x128xf32>
    %23 = vector.shape_cast %22 : vector<1x1x8x128xf32> to vector<8x128xf32>
    %cst_18 = arith.constant dense<0.000000e+00> : vector<8x128xf32>
    %24 = vector.multi_reduction <add>, %12, %cst_18 [0] : vector<2x8x128xf32> to vector<8x128xf32>
    %25 = arith.addf %23, %24 : vector<8x128xf32>
    %c0_19 = arith.constant 0 : index
    %c1_20 = arith.constant 1 : index
    %c0_21 = arith.constant 0 : index
    %c0_22 = arith.constant 0 : index
    %26 = vector.load %arg4[%c0_19, %c1_20, %c0_21, %c0_22] : memref<1x3x8x128xf32, #tpu.memory_space<vmem>>, vector<1x1x8x128xf32>
    %27 = vector.shape_cast %26 : vector<1x1x8x128xf32> to vector<8x128xf32>
    %28 = vector.shape_cast %25 : vector<8x128xf32> to vector<1x1x8x128xf32>
    tpu.vector_store %arg4[%c0_19, %c1_20, %c0_21, %c0_22], %28 {strides = array<i32>} : memref<1x3x8x128xf32, #tpu.memory_space<vmem>>, vector<1x1x8x128xf32>,
    %c0_23 = arith.constant 0 : index
    %c2 = arith.constant 2 : index
    %c0_24 = arith.constant 0 : index
    %c0_25 = arith.constant 0 : index
    %29 = vector.load %arg4[%c0_23, %c2, %c0_24, %c0_25] : memref<1x3x8x128xf32, #tpu.memory_space<vmem>>, vector<1x1x8x128xf32>
    %30 = vector.shape_cast %29 : vector<1x1x8x128xf32> to vector<8x128xf32>
    %cst_26 = arith.constant dense<0.000000e+00> : vector<8x128xf32>
    %31 = vector.multi_reduction <add>, %13, %cst_26 [0] : vector<2x8x128xf32> to vector<8x128xf32>
    %32 = arith.addf %30, %31 : vector<8x128xf32>
    %c0_27 = arith.constant 0 : index
    %c2_28 = arith.constant 2 : index
    %c0_29 = arith.constant 0 : index
    %c0_30 = arith.constant 0 : index
    %33 = vector.load %arg4[%c0_27, %c2_28, %c0_29, %c0_30] : memref<1x3x8x128xf32, #tpu.memory_space<vmem>>, vector<1x1x8x128xf32>
    %34 = vector.shape_cast %33 : vector<1x1x8x128xf32> to vector<8x128xf32>
    %35 = vector.shape_cast %32 : vector<8x128xf32> to vector<1x1x8x128xf32>
    tpu.vector_store %arg4[%c0_27, %c2_28, %c0_29, %c0_30], %35 {strides = array<i32>} : memref<1x3x8x128xf32, #tpu.memory_space<vmem>>, vector<1x1x8x128xf32>,
    return
  }
  func.func @transform_0(%arg0: i32, %arg1: i32) -> (i32, i32) {
    %c1_i32 = arith.constant 1 : i32
    %0 = arith.muli %arg0, %c1_i32 : i32
    %1 = arith.addi %0, %arg1 : i32
    %c0_i32 = arith.constant 0 : i32
    %2 = arith.minsi %1, %c0_i32 : i32
    %c0_i32_0 = arith.constant 0 : i32
    %c0_i32_1 = arith.constant 0 : i32
    return %2, %c0_i32_0 : i32, i32
  }
  func.func @transform_1(%arg0: i32, %arg1: i32) -> (i32, i32) {
    %c1_i32 = arith.constant 1 : i32
    %0 = arith.muli %arg0, %c1_i32 : i32
    %1 = arith.addi %0, %arg1 : i32
    %c0_i32 = arith.constant 0 : i32
    %2 = arith.minsi %1, %c0_i32 : i32
    %c0_i32_0 = arith.constant 0 : i32
    %c0_i32_1 = arith.constant 0 : i32
    return %2, %c0_i32_0 : i32, i32
  }
  func.func @transform_2(%arg0: i32, %arg1: i32) -> (i32, i32, i32, i32) {
    %c0_i32 = arith.constant 0 : i32
    %c0_i32_0 = arith.constant 0 : i32
    %c0_i32_1 = arith.constant 0 : i32
    %c0_i32_2 = arith.constant 0 : i32
    return %arg0, %c0_i32, %c0_i32_0, %c0_i32_1 : i32, i32, i32, i32
  }
}

</mosaic_0001>

<llo_original>
// kernel: tpu_custom_call.1
$region0: #{tpu_custom_call.1}
  #allocation0 [shape = 'u32[]', space=smem, size = 0x4, offset = 0x4, fixed_abs, tag = 'smem constant byte address 0x4 - core index']
  #allocation1 [shape = 'u32[144,128]{1,0:T(1,128)}', space=vmem, size = 0x12000, scoped, tag = 'internal scratch']
  %s0 = inlined_call_operand.hbm [shape: f32[16,128], index: 0, kind: input, shape index: {}]
  %s1 = inlined_call_operand.hbm [shape: f32[16,128], index: 1, kind: input, shape index: {}]
  %s2 = inlined_call_operand.hbm [shape: f32[1,3,8,128], index: 2, kind: output, shape index: {}]
  %s3 = sld [smem:[#allocation0]]
  $region30: #{tpu_custom_call.1} parent=0
    _
  %s5 = ssub.s32 1, %s3
  %s6 = scalar_select 0, %s5, %s3
  $region1: #{tpu_custom_call.1} parent=0
    #allocation2 [shape = 'u8[8192]{0}', space=vmem, size = 0x2000, scoped, tag = 'input window, operand 0, single buffered']
    #allocation3 [shape = 's32[1]{0}', space=sflag, size = 0x4, scoped, tag = 'scoped memory for tpu_custom_call.1']
    #allocation4 [shape = 's32[1]{0}', space=sflag, size = 0x4, scoped, tag = 'scoped memory for tpu_custom_call.1']
    #allocation5 [shape = 'u8[8192]{0}', space=vmem, size = 0x2000, scoped, tag = 'input window, operand 1, single buffered']
    #allocation6 [shape = 's32[1]{0}', space=sflag, size = 0x4, scoped, tag = 'scoped memory for tpu_custom_call.1']
    #allocation7 [shape = 'u8[12288]{0}', space=vmem, size = 0x3000, scoped, tag = 'output window, operand 0, single buffered']
    %7 = vsyncpa [#allocation3], 0
    %8 = vsyncpa [#allocation6], 0
    %9 = vsyncpa [#allocation4], 0
    // Predicated region
    $region2: #{tpu_custom_call.1} parent=1 // pred_check
      _
    $region3: #{tpu_custom_call.1} parent=1 // pred_check_branch
      %11 = sbr.rel (0) target = $region5
    $region4: #{tpu_custom_call.1} parent=1 // pred_region
      %s12 = sadd.s32 0, 0
      %p13 = scmp.lt.s32.totalorder %s12, 0
      %s14 = scalar_select %p13, %s12, 0
      %s15 = smul.u32 2, %s14
      %s17 = ssub.s32 256, 256
      %18 = vsyncadd [#allocation3], %s17
      %s19 = smul.addr %s15, 128
      %s20 = scalar_lea.hbm %s0, %s19
      %s21 = sshll.u32 [#allocation2], 4
      %s22 = int_to_ptr.vmem [resolvable:$true] %s21
      %27 = dma.hbm_to_vmem [thread:$0]  %s20, 256, %s22, [#allocation3], 128, 128, 8
    $region5: #{tpu_custom_call.1} parent=1 // pred_fallthru
      _
    // Predicated region
    $region6: #{tpu_custom_call.1} parent=1 // pred_check
      _
    $region7: #{tpu_custom_call.1} parent=1 // pred_check_branch
      %29 = sbr.rel (0) target = $region9
    $region8: #{tpu_custom_call.1} parent=1 // pred_region
      %s30 = sadd.s32 0, 0
      %p31 = scmp.lt.s32.totalorder %s30, 0
      %s32 = scalar_select %p31, %s30, 0
      %s33 = smul.u32 2, %s32
      %s35 = ssub.s32 256, 256
      %36 = vsyncadd [#allocation6], %s35
      %s37 = smul.addr %s33, 128
      %s38 = scalar_lea.hbm %s1, %s37
      %s39 = sshll.u32 [#allocation5], 4
      %s40 = int_to_ptr.vmem [resolvable:$true] %s39
      %45 = dma.hbm_to_vmem [thread:$0]  %s38, 256, %s40, [#allocation6], 128, 128, 8
    $region9: #{tpu_custom_call.1} parent=1 // pred_fallthru
      _
    // Predicated region
    $region10: #{tpu_custom_call.1} parent=1 // pred_check
      _
    $region11: #{tpu_custom_call.1} parent=1 // pred_check_branch
      %47 = sbr.rel (0) target = $region13
    $region12: #{tpu_custom_call.1} parent=1 // pred_region
      %48 = dma.done [#allocation3], 256
    $region13: #{tpu_custom_call.1} parent=1 // pred_fallthru
      _
    // Predicated region
    $region14: #{tpu_custom_call.1} parent=1 // pred_check
      _
    $region15: #{tpu_custom_call.1} parent=1 // pred_check_branch
      %50 = sbr.rel (0) target = $region17
    $region16: #{tpu_custom_call.1} parent=1 // pred_region
      %51 = dma.done [#allocation6], 256
    $region17: #{tpu_custom_call.1} parent=1 // pred_fallthru
      _
    %s52 = sadd.s32 0, 0
    %p53 = scmp.lt.s32.totalorder %s52, 0
    %s54 = scalar_select %p53, %s52, 0
    %s55 = smul.u32 2, %s54
    %s56 = sadd.s32 0, 0
    %p57 = scmp.lt.s32.totalorder %s56, 0
    %s58 = scalar_select %p57, %s56, 0
    %s59 = smul.u32 2, %s58
    %p60 = scmp.eq.s32.totalorder 0, 0
    // Predicated region
    $region18: #{tpu_custom_call.1} parent=1 // pred_check
      %p61 = pneg %p60
    $region19: #{tpu_custom_call.1} parent=1 // pred_check_branch
      %63 = sbr.rel (%p61) target = $region21
    $region20: #{tpu_custom_call.1} parent=1 // pred_region
      %64 = vst [vmem:[#allocation7] sm:$0xff] 0.0
      %65 = vst [vmem:[#allocation7 + $0x8] sm:$0xff] 0.0
      %66 = vst [vmem:[#allocation7 + $0x10] sm:$0xff] 0.0
    $region21: #{tpu_custom_call.1} parent=1 // pred_fallthru
      _
    %v67 = vld [vmem:[#allocation2] sm:$0xff]
    %v68 = vld [vmem:[#allocation2 + $0x8] sm:$0xff]
    %v69 = vld [vmem:[#allocation5] sm:$0xff]
    %v70 = vld [vmem:[#allocation5 + $0x8] sm:$0xff]
    %v71 = vmul.f32 %v67, 0.5
    %v72 = vmul.f32 %v68, 0.5
    %v73 = vtanh.pop %v71
    %v74 = vtanh.pop %v72
    %v75 = vadd.f32 %v73, 1.0
    %v76 = vadd.f32 %v74, 1.0
    %v77 = vmul.f32 %v75, 0.5
    %v78 = vmul.f32 %v76, 0.5
    %v79 = vld [vmem:[#allocation7] sm:$0xff]
    %v80 = vmul.f32 %v77, %v69
    %v81 = vmul.f32 %v78, %v70
    %v82 = vadd.f32 %v80, %v81
    %v83 = vadd.f32 %v79, %v82
    %84 = vst [vmem:[#allocation7] sm:$0xff] %v83
    %s85 = scalar_lea.vmem [#allocation7], 8
    %v86 = vld [vmem:[%s85] sm:$0xff]
    %v87 = vadd.f32 %v77, %v78
    %v88 = vadd.f32 %v86, %v87
    %89 = vst [vmem:[%s85] sm:$0xff] %v88
    %s90 = scalar_lea.vmem [#allocation7], 16
    %v91 = vld [vmem:[%s90] sm:$0xff]
    %v92 = vadd.f32 %v69, %v70
    %v93 = vadd.f32 %v91, %v92
    %94 = vst [vmem:[%s90] sm:$0xff] %v93
    // Predicated region
    $region22: #{tpu_custom_call.1} parent=1 // pred_check
      _
    $region23: #{tpu_custom_call.1} parent=1 // pred_check_branch
      %96 = sbr.rel (0) target = $region25
    $region24: #{tpu_custom_call.1} parent=1 // pred_region
      %s98 = ssub.s32 384, 384
      %99 = vsyncadd [#allocation4], %s98
      %s100 = sshll.u32 [#allocation7], 4
      %s101 = int_to_ptr.vmem [resolvable:$true] %s100
      %106 = dma.vmem_to_hbm [thread:$0]  %s101, 384, %s2, [#allocation4], 128, 128, 8
    $region25: #{tpu_custom_call.1} parent=1 // pred_fallthru
      _
    // Predicated region
    $region26: #{tpu_custom_call.1} parent=1 // pred_check
      _
    $region27: #{tpu_custom_call.1} parent=1 // pred_check_branch
      %108 = sbr.rel (0) target = $region29
    $region28: #{tpu_custom_call.1} parent=1 // pred_region
      %109 = dma.done [#allocation4], 384
    $region29: #{tpu_custom_call.1} parent=1 // pred_fallthru
      _
    %110 = vsyncpa [#allocation3], 1
    %111 = vsyncpa [#allocation6], 1
    %112 = vsyncpa [#allocation4], 1

</llo_original>
